<compile_context>
chip_gen: v5e
topology: v5e:2x2
jax: 0.10.0
libtpu: 0.0.40
codegen_flags: <defaults>
</compile_context>

<pallas_src>
import functools

import jax
import jax.numpy as jnp
from jax.experimental import pallas as pl
from jax.experimental.pallas import tpu as pltpu


def _noisy_affine_kernel(x_ref, a_ref, b_ref, o_ref, *, use_std_scale, inv_hw):
    # x_ref: (rt, HW)  one row per (b, c) channel (spatial on lanes)
    # a_ref: (rt, 1)   a = 1 / sqrt(chi2(N-1)/N)          (inverse scale noise)
    # b_ref: (rt, 1)   b = shift_noise * a                 (shift already /sqrt(N))
    x = x_ref[...]
    a = a_ref[...]
    b = b_ref[...]
    if use_std_scale:
        xf = x.astype(jnp.float32)
        # Two-pass population variance (correction=0): subtract the per-row
        # mean before squaring so it does not cancel when |mean| >> std
        # (unlike the one-pass E[x^2] - E[x]^2 form).
        mean = jnp.sum(xf, axis=-1, keepdims=True) * inv_hw
        d = xf - mean
        var = jnp.sum(d * d, axis=-1, keepdims=True) * inv_hw
        b = b * jnp.sqrt(var)
        y = xf * a - b
    else:
        # Single FMA-shaped apply; upcast fuses per-vreg.
        y = x.astype(jnp.float32) * a - b
    o_ref[...] = y.astype(o_ref.dtype)


def _choose_row_tile(bc, hw, itemsize, use_std_scale,
                     target_block_bytes=2 << 20,
                     vmem_budget_bytes=24 << 20):
    """Rows-per-block tile choice.

    * VMEM footprint counts lane padding (each row occupies round_up(HW, 128)
      lanes in VMEM) plus the in-kernel f32 temporaries of the reduction.
    * HBM-granularity target uses true HW bytes (what the DMA actually moves).
    * Rounds to the sublane packing of the dtype and aims for an even number
      of near-equal grid steps so dimension_semantics=("parallel",) shards
      cleanly across both TensorCores on v7x (no effect on v5e/v6e).
    """
    row_align = 8 if itemsize >= 4 else (16 if itemsize == 2 else 32)
    if bc <= row_align:
        return bc

    hw_lanes = ((hw + 127) // 128) * 128
    io_per_row = 2 * 2 * hw_lanes * itemsize            # in + out, double-buffered
    tmp_per_row = (2 if use_std_scale else 1) * hw_lanes * 4
    vmem_rows = max(row_align, vmem_budget_bytes // (io_per_row + tmp_per_row))
    tgt_rows = max(row_align, target_block_bytes // max(1, hw * itemsize))

    rt = min(int(tgt_rows), int(vmem_rows), bc)
    rt = max(row_align, (rt // row_align) * row_align)

    # Balance the 1-D grid: even step count with near-equal steps.
    n_steps = max(2, pl.cdiv(bc, rt))
    if n_steps % 2:
        n_steps += 1
    rt = pl.cdiv(bc, n_steps)
    rt = ((rt + row_align - 1) // row_align) * row_align
    return min(rt, bc)


def noisy_affine_transform(
    x,
    key,
    batch_size,
    *,
    scale_noise=True,
    shift_noise=True,
    scale_shift=True,
    training=True,
    donate_input=False,
    target_block_bytes=2 << 20,
):
    """JAX/Pallas equivalent of NoisyAffineTransform.forward (NCHW input)."""
    if not training or not (scale_noise or shift_noise):
        return x

    B, C, H, W = x.shape
    N = batch_size
    BC, HW = B * C, H * W
    itemsize = jnp.dtype(x.dtype).itemsize
    use_std_scale = bool(scale_shift and shift_noise)

    k_shift, k_chi2 = jax.random.split(key)

    if shift_noise:
        shift = jax.random.normal(k_shift, (BC, 1), jnp.float32) / jnp.sqrt(
            jnp.float32(N)
        )
    else:
        shift = jnp.zeros((BC, 1), jnp.float32)

    if scale_noise:
        # Chi2(k) == 2 * Gamma(k/2, scale=1)
        chi2 = 2.0 * jax.random.gamma(k_chi2, (N - 1) / 2.0, (BC, 1), jnp.float32)
        inv_scale = 1.0 / jnp.sqrt(chi2 / N)
    else:
        inv_scale = jnp.ones((BC, 1), jnp.float32)

    # Fold per-row scalars: apply is y = x*a - b (b picks up *std in-kernel).
    a = inv_scale
    b = shift * inv_scale

    # NCHW -> (B*C, H*W); no HBM pad/slice passes — block last dim equals the
    # full array dim, which is always legal.
    x2 = x.reshape(BC, HW)

    # TODO(synk): if one (rt, HW) row block cannot fit VMEM (very large H*W),
    # split H*W with a second "arbitrary" grid axis (reduce pass + apply pass).
    rt = _choose_row_tile(BC, HW, itemsize, use_std_scale, target_block_bytes)
    grid = (pl.cdiv(BC, rt),)

    hw_lanes = ((HW + 127) // 128) * 128
    block_bytes = rt * hw_lanes * itemsize
    tmp_bytes = (2 if use_std_scale else 1) * rt * hw_lanes * 4
    vmem_limit = int(min(48 << 20, max(8 << 20, (4 * block_bytes + tmp_bytes) * 5 // 4)))

    kernel = functools.partial(
        _noisy_affine_kernel,
        use_std_scale=use_std_scale,
        inv_hw=float(1.0 / HW),
    )

    cost = pl.CostEstimate(
        flops=(6 if use_std_scale else 2) * BC * HW,
        transcendentals=BC,
        bytes_accessed=2 * BC * HW * itemsize + 2 * BC * 4 * 2,
    )

    out = pl.pallas_call(
        kernel,
        out_shape=jax.ShapeDtypeStruct((BC, HW), x.dtype),
        grid_spec=pltpu.PrefetchScalarGridSpec(
            num_scalar_prefetch=0,
            grid=grid,
            in_specs=[
                pl.BlockSpec((rt, HW), lambda i: (i, 0)),
                pl.BlockSpec((rt, 1), lambda i: (i, 0)),
                pl.BlockSpec((rt, 1), lambda i: (i, 0)),
            ],
            out_specs=pl.BlockSpec((rt, HW), lambda i: (i, 0)),
        ),
        compiler_params=pltpu.CompilerParams(
            dimension_semantics=("parallel",),
            vmem_limit_bytes=vmem_limit,
        ),
        cost_estimate=cost,
        input_output_aliases={0: 0} if donate_input else {},
    )(x2, a, b)

    return out.reshape(B, C, H, W)


def _reference(x, key, batch_size, *, scale_noise=True, shift_noise=True,
               scale_shift=True):
    """Pure-JAX reference with the same RNG draws (for correctness check)."""
    B, C, H, W = x.shape
    N = batch_size
    k_shift, k_chi2 = jax.random.split(key)
    if shift_noise:
        shift = jax.random.normal(k_shift, (B * C, 1), jnp.float32).reshape(
            B, C, 1, 1
        ) / jnp.sqrt(jnp.float32(N))
        if scale_shift:
            shift = shift * jnp.std(
                x.astype(jnp.float32), axis=(2, 3), keepdims=True
            )  # correction=0 (population)
        x = x - shift
    if scale_noise:
        chi2 = 2.0 * jax.random.gamma(
            k_chi2, (N - 1) / 2.0, (B * C, 1), jnp.float32
        ).reshape(B, C, 1, 1)
        x = x / jnp.sqrt(chi2 / N)
    return x


if __name__ == "__main__":
    batch_size = 64  # N in the module (self.batch_size)
    key = jax.random.PRNGKey(0)
    k_x1, k_x2, k_n1, k_n2 = jax.random.split(key, 4)

    # Case 1: lane-aligned spatial map (H*W % 128 == 0), nonzero mean to
    # exercise the mean-subtracted variance path.
    x1 = jax.random.normal(k_x1, (2, 4, 16, 16), jnp.float32) * 3.0 + 5.0
    out1 = jax.block_until_ready(noisy_affine_transform(x1, k_n1, batch_size))
    ref1 = _reference(x1, k_n1, batch_size)
    assert out1.shape == x1.shape and out1.dtype == x1.dtype
    assert jnp.allclose(out1, ref1, atol=1e-5, rtol=1e-5), "mismatch (aligned HW)"

    # Case 2: ragged spatial map (H*W = 49): exercises the un-padded lane path
    # (block last dim equals full array dim, masked store tail).
    x2 = jax.random.normal(k_x2, (2, 4, 7, 7), jnp.float32) * 0.5 - 2.0
    out2 = jax.block_until_ready(noisy_affine_transform(x2, k_n2, batch_size))
    ref2 = _reference(x2, k_n2, batch_size)
    assert out2.shape == x2.shape and out2.dtype == x2.dtype
    assert jnp.allclose(out2, ref2, atol=1e-5, rtol=1e-5), "mismatch (ragged HW)"

    print("KERNEL_OK")
</pallas_src>

<mosaic_0001>
module attributes {stable_mosaic.version = 11 : i64} {
  func.func @_noisy_affine_kernel(%arg0: i32, %arg1: memref<8x256xf32, #tpu.memory_space<vmem>>, %arg2: memref<8x1xf32, #tpu.memory_space<vmem>>, %arg3: memref<8x1xf32, #tpu.memory_space<vmem>>, %arg4: memref<8x256xf32, #tpu.memory_space<vmem>>) attributes {dimension_semantics = [#tpu.dimension_semantics<parallel>], iteration_bounds = array<i64: 1>, scalar_prefetch = 0 : i64, scratch_operands = 0 : i64, tpu.core_type = #tpu.core_type<tc>, window_params = [{transform_indices = @transform_0, window_bounds = array<i64: 8, 256>}, {transform_indices = @transform_1, window_bounds = array<i64: 8, 1>}, {transform_indices = @transform_2, window_bounds = array<i64: 8, 1>}, {transform_indices = @transform_3, window_bounds = array<i64: 8, 256>}]} {
    %c0 = arith.constant 0 : index
    %c0_0 = arith.constant 0 : index
    %0 = vector.load %arg1[%c0, %c0_0] : memref<8x256xf32, #tpu.memory_space<vmem>>, vector<8x256xf32>
    %c0_1 = arith.constant 0 : index
    %c0_2 = arith.constant 0 : index
    %1 = vector.load %arg2[%c0_1, %c0_2] : memref<8x1xf32, #tpu.memory_space<vmem>>, vector<8x1xf32>
    %c0_3 = arith.constant 0 : index
    %c0_4 = arith.constant 0 : index
    %2 = vector.load %arg3[%c0_3, %c0_4] : memref<8x1xf32, #tpu.memory_space<vmem>>, vector<8x1xf32>
    %cst = arith.constant dense<0.000000e+00> : vector<8xf32>
    %3 = vector.multi_reduction <add>, %0, %cst [1] : vector<8x256xf32> to vector<8xf32>
    %4 = vector.shape_cast %3 : vector<8xf32> to vector<8x1xf32>
    %cst_5 = arith.constant 3.906250e-03 : f32
    %5 = vector.broadcast %cst_5 : f32 to vector<8x1xf32>
    %6 = arith.mulf %4, %5 : vector<8x1xf32>
    %7 = vector.broadcast %6 : vector<8x1xf32> to vector<8x256xf32>
    %8 = arith.subf %0, %7 : vector<8x256xf32>
    %9 = arith.mulf %8, %8 : vector<8x256xf32>
    %cst_6 = arith.constant dense<0.000000e+00> : vector<8xf32>
    %10 = vector.multi_reduction <add>, %9, %cst_6 [1] : vector<8x256xf32> to vector<8xf32>
    %11 = vector.shape_cast %10 : vector<8xf32> to vector<8x1xf32>
    %cst_7 = arith.constant 3.906250e-03 : f32
    %12 = vector.broadcast %cst_7 : f32 to vector<8x1xf32>
    %13 = arith.mulf %11, %12 : vector<8x1xf32>
    %14 = math.sqrt %13 : vector<8x1xf32>
    %15 = arith.mulf %2, %14 : vector<8x1xf32>
    %16 = vector.broadcast %1 : vector<8x1xf32> to vector<8x256xf32>
    %17 = arith.mulf %0, %16 : vector<8x256xf32>
    %18 = vector.broadcast %15 : vector<8x1xf32> to vector<8x256xf32>
    %19 = arith.subf %17, %18 : vector<8x256xf32>
    %c0_8 = arith.constant 0 : index
    %c0_9 = arith.constant 0 : index
    %20 = vector.load %arg4[%c0_8, %c0_9] : memref<8x256xf32, #tpu.memory_space<vmem>>, vector<8x256xf32>
    tpu.vector_store %arg4[%c0_8, %c0_9], %19 {strides = array<i32>} : memref<8x256xf32, #tpu.memory_space<vmem>>, vector<8x256xf32>,
    return
  }
  func.func @transform_0(%arg0: i32) -> (i32, i32) {
    %c0_i32 = arith.constant 0 : i32
    %c0_i32_0 = arith.constant 0 : i32
    return %arg0, %c0_i32 : i32, i32
  }
  func.func @transform_1(%arg0: i32) -> (i32, i32) {
    %c0_i32 = arith.constant 0 : i32
    %c0_i32_0 = arith.constant 0 : i32
    return %arg0, %c0_i32 : i32, i32
  }
  func.func @transform_2(%arg0: i32) -> (i32, i32) {
    %c0_i32 = arith.constant 0 : i32
    %c0_i32_0 = arith.constant 0 : i32
    return %arg0, %c0_i32 : i32, i32
  }
  func.func @transform_3(%arg0: i32) -> (i32, i32) {
    %c0_i32 = arith.constant 0 : i32
    %c0_i32_0 = arith.constant 0 : i32
    return %arg0, %c0_i32 : i32, i32
  }
}

</mosaic_0001>

<llo_original>
// kernel: tpu_custom_call.1
$region0: #{tpu_custom_call.1}
  #allocation0 [shape = 'u32[]', space=smem, size = 0x4, offset = 0x4, fixed_abs, tag = 'smem constant byte address 0x4 - core index']
  #allocation1 [shape = 'u32[72,128]{1,0:T(1,128)}', space=vmem, size = 0x9000, scoped, tag = 'internal scratch']
  %s0 = inlined_call_operand.vmem [shape: f32[8,256], index: 0, kind: input, shape index: {}]
  %s1 = inlined_call_operand.vmem [shape: f32[8,1], index: 1, kind: input, shape index: {}]
  %s2 = inlined_call_operand.vmem [shape: f32[8,1], index: 2, kind: input, shape index: {}]
  %s3 = inlined_call_operand.hbm [shape: f32[8,256], index: 3, kind: output, shape index: {}]
  %s4 = sld [smem:[#allocation0]]
  $region22: #{tpu_custom_call.1} parent=0
    _
  %s6 = ssub.s32 1, %s4
  %s7 = scalar_select 0, %s6, %s4
  $region1: #{tpu_custom_call.1} parent=0
    #allocation2 [shape = 'u8[8192]{0}', space=vmem, size = 0x2000, scoped, tag = 'output window, operand 0, single buffered']
    #allocation3 [shape = 's32[1]{0}', space=sflag, size = 0x4, scoped, tag = 'scoped memory for tpu_custom_call.1']
    %8 = vsyncpa [#allocation3], 0
    // Predicated region
    $region2: #{tpu_custom_call.1} parent=1 // pred_check
      _
    $region3: #{tpu_custom_call.1} parent=1 // pred_check_branch
      %10 = sbr.rel (0) target = $region5
    $region4: #{tpu_custom_call.1} parent=1 // pred_region
      _
    $region5: #{tpu_custom_call.1} parent=1 // pred_fallthru
      _
    // Predicated region
    $region6: #{tpu_custom_call.1} parent=1 // pred_check
      _
    $region7: #{tpu_custom_call.1} parent=1 // pred_check_branch
      %12 = sbr.rel (0) target = $region9
    $region8: #{tpu_custom_call.1} parent=1 // pred_region
      _
    $region9: #{tpu_custom_call.1} parent=1 // pred_fallthru
      _
    // Predicated region
    $region10: #{tpu_custom_call.1} parent=1 // pred_check
      _
    $region11: #{tpu_custom_call.1} parent=1 // pred_check_branch
      %14 = sbr.rel (0) target = $region13
    $region12: #{tpu_custom_call.1} parent=1 // pred_region
      _
    $region13: #{tpu_custom_call.1} parent=1 // pred_fallthru
      _
    %v15 = vld [vmem:[%s0] sm:$0xff]
    %v16 = vld [vmem:[%s0 + $0x8] sm:$0xff]
    %v17 = vld [vmem:[%s1] sm:$0xff]
    %v18 = vld [vmem:[%s2] sm:$0xff]
    %v19 = vadd.f32 %v15, %v16
    %20 = vadd.xlane.f32.xlu0 %v19
    %v21 = vpop.xlane.xlu0 %20
    %v22 = vmul.f32 %v21, 0.00390625
    %v23 = vsub.f32 %v15, %v22
    %v24 = vsub.f32 %v16, %v22
    %v25 = vmul.f32 %v23, %v23
    %v26 = vmul.f32 %v24, %v24
    %v27 = vadd.f32 %v25, %v26
    %28 = vadd.xlane.f32.xlu0 %v27
    %v29 = vpop.xlane.xlu0 %28
    %v30 = vmul.f32 %v29, 0.00390625
    %v31 = vrsqrt.pop %v30
    %v32 = vmul.f32 %v31, %v30
    %v33 = vmul.f32 %v32, %v31
    %v34 = vmul.f32 0.5, %v33
    %v35 = vsub.f32 1.5, %v34
    %v36 = vmul.f32 %v31, %v35
    %v37 = vmul.f32 %v30, %v36
    %vm38 = vcmp.eq.f32.partialorder %v30, inf
    %v39 = vsel %vm38, %v30, %v37
    %vm40 = vcmp.eq.f32.partialorder %v30, 0.0
    %v41 = vand.u32 %v30, 2147483648
    %v42 = vsel %vm40, %v41, %v39
    %v43 = vmul.f32 %v18, %v42
    %45 = vset.pattern.permute.xlu0 0
    %46 = vperm.xlu0 %45, %v17
    %v47 = vpop.permute.xlu0 %46
    %v49 = vmul.f32 %v15, %v47
    %v50 = vmul.f32 %v16, %v47
    %52 = vset.pattern.permute.xlu0 0
    %53 = vperm.xlu0 %52, %v43
    %v54 = vpop.permute.xlu0 %53
    %v56 = vsub.f32 %v49, %v54
    %v57 = vsub.f32 %v50, %v54
    %58 = vst [vmem:[#allocation2] sm:$0xff] %v56
    %59 = vst [vmem:[#allocation2 + $0x8] sm:$0xff] %v57
    // Predicated region
    $region14: #{tpu_custom_call.1} parent=1 // pred_check
      _
    $region15: #{tpu_custom_call.1} parent=1 // pred_check_branch
      %61 = sbr.rel (0) target = $region17
    $region16: #{tpu_custom_call.1} parent=1 // pred_region
      %63 = vsyncadd [#allocation3], 0
      %s65 = sshll.u32 [#allocation2], 4
      %s66 = int_to_ptr.vmem [resolvable:$true] %s65
      %s67 = sshll.u32 %s3, 4
      %s68 = int_to_ptr.hbm [resolvable:$true] %s67
      %70 = dma.vmem_to_hbm [thread:$0]  %s66, 256, %s68, [#allocation3]
    $region17: #{tpu_custom_call.1} parent=1 // pred_fallthru
      _
    // Predicated region
    $region18: #{tpu_custom_call.1} parent=1 // pred_check
      _
    $region19: #{tpu_custom_call.1} parent=1 // pred_check_branch
      %72 = sbr.rel (0) target = $region21
    $region20: #{tpu_custom_call.1} parent=1 // pred_region
      %74 = dma.done [#allocation3], 256
    $region21: #{tpu_custom_call.1} parent=1 // pred_fallthru
      _
    %75 = vsyncpa [#allocation3], 1

</llo_original>
